<compile_context>
chip_gen: v5e
topology: v5e:2x2
jax: 0.10.0
libtpu: 0.0.40
codegen_flags: <defaults>
</compile_context>

<pallas_src>
import math

import jax
import jax.numpy as jnp
from jax.experimental import pallas as pl
from jax.experimental.pallas import tpu as pltpu
from jax.scipy.linalg import block_diag


def _round_up(n, m):
    return -(-n // m) * m


def _channel_attention_kernel(x_ref, w1t_ref, w2bd_ref, o_ref):
    # x_ref   : [rt, N_in, S]            one row-block, S = H*W on the lane axis
    # w1t_ref : [N_in, N_out*M]          fc1, pre-flattened/transposed (f32)
    # w2bd_ref: [N_out*M, N_out*N_in]    fc2 as a block-diagonal matrix (f32)
    # o_ref   : [rt, N_out*N_in]         lane-dense sigmoid output slab
    rows = x_ref.shape[0]

    # ---- Spatial pooling (the only HBM-heavy part): mean & max over lanes ----
    x = x_ref[...].astype(jnp.float32)            # upcast in-kernel (bf16 inputs ok)
    d_avg = jnp.mean(x, axis=-1)                  # [rows, N_in]
    d_max = jnp.max(x, axis=-1)                   # [rows, N_in]

    # Stack avg/max so the shared-weight MLP runs once (halves weight passes).
    d = jnp.concatenate([d_avg, d_max], axis=0)   # [2*rows, N_in]

    # ---- Layer 1: single MXU matmul over all output channels at once --------
    h = jnp.dot(d, w1t_ref[...],
                preferred_element_type=jnp.float32,
                precision=jax.lax.Precision.HIGHEST)     # [2*rows, N_out*M]
    h = jnp.maximum(h, 0.0)                              # ReLU

    # ---- Layer 2: one matmul against the block-diagonal w2 ------------------
    # Off-diagonal blocks are zero, so the full contraction reproduces the
    # per-output-channel contraction over M and lands lane-dense directly.
    y = jnp.dot(h, w2bd_ref[...],
                preferred_element_type=jnp.float32,
                precision=jax.lax.Precision.HIGHEST)     # [2*rows, N_out*N_in]

    logits = y[:rows] + y[rows:]                         # avg branch + max branch
    o_ref[...] = jax.nn.sigmoid(logits).astype(o_ref.dtype)


def _vmem_capacity_bytes():
    """Per-core VMEM capacity; conservative v7x fallback if the query fails."""
    try:
        return int(pltpu.get_tpu_info().vmem_capacity_bytes)
    except Exception:  # pragma: no cover - older jax / non-TPU tracing
        return 64 << 20


def _pick_row_tile(num_rows, bytes_per_row_f32, vmem_cap):
    """Rows per grid step: multiple of 8, as large as the VMEM budget allows.

    The per-step input-tile budget is ~vmem_cap/8 (capped at 32 MiB), leaving
    room for double buffering, the in-kernel f32 upcast copy, weights and the
    output tile.  For small workloads this collapses to a single grid step on
    every generation (no forced megacore split)."""
    target = min(max(vmem_cap // 8, 4 << 20), 32 << 20)
    rows8 = _round_up(num_rows, 8)
    rt = (target // max(bytes_per_row_f32, 1)) // 8 * 8
    return max(8, min(rt, rows8))


def channel_attention(x, w1, w2):
    """x: [B, 1, G, N_in, H, W] -> [B, N_out, G, N_in, 1, 1] (float32)."""
    B, one, G, N_in, H, W = x.shape
    assert one == 1, "second axis must be the broadcast singleton"
    N_out, M, N_in_w = w1.shape
    assert N_in_w == N_in and w2.shape == (N_out, N_in, M)
    S = H * W

    # Flatten rows = (b, g); input stays in its native dtype (no HBM cast pass).
    R = B * G
    x_flat = x.reshape(R, N_in, S)

    # fc1 flattened+transposed so layer 1 is one plain 2-D matmul; fc2 built as
    # a block-diagonal [N_out*M, N_out*N_in] so layer 2 is also one matmul.
    w1t = w1.reshape(N_out * M, N_in).T.astype(jnp.float32)      # [N_in, N_out*M]
    w2t = jnp.transpose(w2, (0, 2, 1)).astype(jnp.float32)       # [N_out, M, N_in]
    w2bd = block_diag(*[w2t[o] for o in range(N_out)])           # [N_out*M, N_out*N_in]

    # Row tiling: multiple of 8, sized from a generation-aware VMEM budget.
    vmem_cap = _vmem_capacity_bytes()
    bytes_per_row_f32 = N_in * S * 4
    rt = _pick_row_tile(R, bytes_per_row_f32, vmem_cap)
    R_pad = _round_up(R, rt)
    if R_pad != R:
        # Zero rows pool to 0 -> sigmoid 0.5; sliced off below.
        x_flat = jnp.pad(x_flat, ((0, R_pad - R), (0, 0), (0, 0)))
    num_steps = R_pad // rt

    # VMEM budget: double-buffered native input tile + the in-kernel f32 upcast
    # copy + weights + output tiles + MLP temporaries, with headroom, capped
    # below the physical per-core VMEM.
    in_tile_native = rt * N_in * S * x.dtype.itemsize
    in_tile_f32 = rt * bytes_per_row_f32
    w_bytes = (w1t.size + w2bd.size) * 4
    out_tile = rt * N_out * N_in * 4
    mlp_tmp = 2 * rt * (N_in + N_out * M + N_out * N_in) * 4
    vmem_need = 2 * in_tile_native + in_tile_f32 + 2 * w_bytes + 2 * out_tile + mlp_tmp
    vmem_limit = int(min(max(vmem_need + (2 << 20), 16 << 20), int(vmem_cap * 0.9)))

    out = pl.pallas_call(
        _channel_attention_kernel,
        out_shape=jax.ShapeDtypeStruct((R_pad, N_out * N_in), jnp.float32),
        grid_spec=pltpu.PrefetchScalarGridSpec(
            num_scalar_prefetch=0,
            grid=(num_steps,),
            in_specs=[
                # Only the leading (row) dim is blocked; the trailing block
                # dims equal the full array dims (TPU (8,128) block rule).
                pl.BlockSpec((rt, N_in, S), lambda b: (b, 0, 0)),
                pl.BlockSpec((N_in, N_out * M), lambda b: (0, 0)),
                pl.BlockSpec((N_out * M, N_out * N_in), lambda b: (0, 0)),
            ],
            out_specs=pl.BlockSpec((rt, N_out * N_in), lambda b: (b, 0)),
        ),
        compiler_params=pltpu.CompilerParams(
            dimension_semantics=("parallel",),
            vmem_limit_bytes=vmem_limit,
        ),
    )(x_flat, w1t, w2bd)

    # Layout plumbing only (tiny tensor): rows are (b, g), lanes are (o, c).
    out = out[:R].reshape(B, G, N_out, N_in)
    out = jnp.transpose(out, (0, 2, 1, 3))
    return out.reshape(B, N_out, G, N_in, 1, 1)


def reference_forward(x, w1, w2):
    """Direct jnp transcription of the PyTorch forward (same broadcasting)."""
    N_out, M, N_in = w1.shape

    def _linear(inp, w):
        in_reshaped = jnp.expand_dims(inp, axis=-3)
        w_reshaped = w.reshape(1, w.shape[0], 1, w.shape[1], w.shape[2], 1)
        return jnp.sum(in_reshaped * w_reshaped, axis=-2)

    input_mean = jnp.mean(x, axis=(-2, -1))[..., None]
    input_max = jnp.max(x, axis=(-2, -1))[..., None]
    avg_out = _linear(jnp.maximum(_linear(input_mean, w1), 0.0), w2)
    max_out = _linear(jnp.maximum(_linear(input_max, w1), 0.0), w2)
    out = jax.nn.sigmoid(avg_out + max_out)
    return out.reshape(x.shape[0], N_out, x.shape[2], N_in, 1, 1)


if __name__ == "__main__":
    # Small shapes consistent with the module: N_in=4 channels, N_out=8,
    # ratio=1, N_h=4 group elements, 8x8 spatial, batch=2.
    B, N_out, N_in, ratio = 2, 8, 4, 1
    G, H, W = 4, 8, 8
    M = N_in // ratio

    key = jax.random.PRNGKey(0)
    kx, k1, k2 = jax.random.split(key, 3)
    x = jax.random.normal(kx, (B, 1, G, N_in, H, W), dtype=jnp.float32)

    # Deterministic init matching kaiming_uniform_(a=sqrt(5)):
    # bound = 1/sqrt(fan_in), fan_in = size(1) * size(2).
    bound1 = 1.0 / math.sqrt(M * N_in)
    bound2 = 1.0 / math.sqrt(N_in * M)
    w1 = jax.random.uniform(k1, (N_out, M, N_in), jnp.float32, -bound1, bound1)
    w2 = jax.random.uniform(k2, (N_out, N_in, M), jnp.float32, -bound2, bound2)

    out = channel_attention(x, w1, w2)
    out = jax.block_until_ready(out)

    ref = reference_forward(x, w1, w2)
    assert out.shape == (B, N_out, G, N_in, 1, 1)
    # Pooling/ReLU/sigmoid are exact f32 and both matmuls run at
    # precision=HIGHEST, so tight tolerances hold against the f32 reference.
    assert jnp.allclose(out, ref, atol=1e-4, rtol=1e-4)
    print("KERNEL_OK")
</pallas_src>

<mosaic_0001>
module attributes {stable_mosaic.version = 11 : i64} {
  func.func @_channel_attention_kernel(%arg0: i32, %arg1: memref<8x4x64xf32, #tpu.memory_space<vmem>>, %arg2: memref<4x32xf32, #tpu.memory_space<vmem>>, %arg3: memref<32x32xf32, #tpu.memory_space<vmem>>, %arg4: memref<8x32xf32, #tpu.memory_space<vmem>>) attributes {dimension_semantics = [#tpu.dimension_semantics<parallel>], iteration_bounds = array<i64: 1>, scalar_prefetch = 0 : i64, scratch_operands = 0 : i64, tpu.core_type = #tpu.core_type<tc>, window_params = [{transform_indices = @transform_0, window_bounds = array<i64: 8, 4, 64>}, {pipeline_mode = #tpu.pipeline_mode<synchronous>, transform_indices = @transform_1, window_bounds = array<i64: 4, 32>}, {pipeline_mode = #tpu.pipeline_mode<synchronous>, transform_indices = @transform_2, window_bounds = array<i64: 32, 32>}, {transform_indices = @transform_3, window_bounds = array<i64: 8, 32>}]} {
    %c0 = arith.constant 0 : index
    %c0_0 = arith.constant 0 : index
    %c0_1 = arith.constant 0 : index
    %0 = vector.load %arg1[%c0, %c0_0, %c0_1] : memref<8x4x64xf32, #tpu.memory_space<vmem>>, vector<8x4x64xf32>
    %cst = arith.constant dense<0.000000e+00> : vector<8x4xf32>
    %1 = vector.multi_reduction <add>, %0, %cst [2] : vector<8x4x64xf32> to vector<8x4xf32>
    %cst_2 = arith.constant 6.400000e+01 : f32
    %2 = vector.broadcast %cst_2 : f32 to vector<8x4xf32>
    %3 = arith.divf %1, %2 : vector<8x4xf32>
    %cst_3 = arith.constant dense<0xFF800000> : vector<8x4xf32>
    %4 = vector.multi_reduction <maximumf>, %0, %cst_3 [2] : vector<8x4x64xf32> to vector<8x4xf32>
    %5 = tpu.concatenate %3, %4 in 0 : vector<8x4xf32>, vector<8x4xf32> -> vector<16x4xf32>
    %c0_4 = arith.constant 0 : index
    %c0_5 = arith.constant 0 : index
    %6 = vector.load %arg2[%c0_4, %c0_5] : memref<4x32xf32, #tpu.memory_space<vmem>>, vector<4x32xf32>
    %cst_6 = arith.constant dense<0.000000e+00> : vector<16x32xf32>
    %7 = tpu.matmul %5, %6, %cst_6 {dimension_numbers = #tpu.dot_dimension_numbers<[1], [0], [0], [1], [0, 0, 1, 1], [], []>, precision = #tpu.contract_precision<fp32>} : vector<16x4xf32>, vector<4x32xf32>, vector<16x32xf32> -> vector<16x32xf32>
    %cst_7 = arith.constant 0.000000e+00 : f32
    %8 = vector.broadcast %cst_7 : f32 to vector<16x32xf32>
    %9 = arith.maximumf %7, %8 : vector<16x32xf32>
    %c0_8 = arith.constant 0 : index
    %c0_9 = arith.constant 0 : index
    %10 = vector.load %arg3[%c0_8, %c0_9] : memref<32x32xf32, #tpu.memory_space<vmem>>, vector<32x32xf32>
    %cst_10 = arith.constant dense<0.000000e+00> : vector<16x32xf32>
    %11 = tpu.matmul %9, %10, %cst_10 {dimension_numbers = #tpu.dot_dimension_numbers<[1], [0], [0], [1], [0, 0, 1, 1], [], []>, precision = #tpu.contract_precision<fp32>} : vector<16x32xf32>, vector<32x32xf32>, vector<16x32xf32> -> vector<16x32xf32>
    %12 = vector.extract_strided_slice %11 {offsets = [0, 0], sizes = [8, 32], strides = [1, 1]} : vector<16x32xf32> to vector<8x32xf32>
    %13 = vector.extract_strided_slice %11 {offsets = [8, 0], sizes = [8, 32], strides = [1, 1]} : vector<16x32xf32> to vector<8x32xf32>
    %14 = arith.addf %12, %13 : vector<8x32xf32>
    %15 = arith.negf %14 : vector<8x32xf32>
    %16 = math.exp %15 : vector<8x32xf32>
    %cst_11 = arith.constant 1.000000e+00 : f32
    %17 = vector.broadcast %cst_11 : f32 to vector<8x32xf32>
    %18 = arith.addf %17, %16 : vector<8x32xf32>
    %19 = arith.divf %17, %18 : vector<8x32xf32>
    %c0_12 = arith.constant 0 : index
    %c0_13 = arith.constant 0 : index
    %20 = vector.load %arg4[%c0_12, %c0_13] : memref<8x32xf32, #tpu.memory_space<vmem>>, vector<8x32xf32>
    tpu.vector_store %arg4[%c0_12, %c0_13], %19 {strides = array<i32>} : memref<8x32xf32, #tpu.memory_space<vmem>>, vector<8x32xf32>,
    return
  }
  func.func @transform_0(%arg0: i32) -> (i32, i32, i32) {
    %c0_i32 = arith.constant 0 : i32
    %c0_i32_0 = arith.constant 0 : i32
    %c0_i32_1 = arith.constant 0 : i32
    return %arg0, %c0_i32, %c0_i32_0 : i32, i32, i32
  }
  func.func @transform_1(%arg0: i32) -> (i32, i32) {
    %c0_i32 = arith.constant 0 : i32
    %c0_i32_0 = arith.constant 0 : i32
    %c0_i32_1 = arith.constant 0 : i32
    return %c0_i32, %c0_i32_0 : i32, i32
  }
  func.func @transform_2(%arg0: i32) -> (i32, i32) {
    %c0_i32 = arith.constant 0 : i32
    %c0_i32_0 = arith.constant 0 : i32
    %c0_i32_1 = arith.constant 0 : i32
    return %c0_i32, %c0_i32_0 : i32, i32
  }
  func.func @transform_3(%arg0: i32) -> (i32, i32) {
    %c0_i32 = arith.constant 0 : i32
    %c0_i32_0 = arith.constant 0 : i32
    return %arg0, %c0_i32 : i32, i32
  }
}

</mosaic_0001>

<llo_original>
// kernel: tpu_custom_call.1
$region0: #{tpu_custom_call.1}
  #allocation0 [shape = 'u32[]', space=smem, size = 0x4, offset = 0x4, fixed_abs, tag = 'smem constant byte address 0x4 - core index']
  #allocation1 [shape = 'u32[72,128]{1,0:T(1,128)}', space=vmem, size = 0x9000, scoped, tag = 'internal scratch']
  %s0 = inlined_call_operand.hbm [shape: f32[8,4,64], index: 0, kind: input, shape index: {}]
  %s1 = inlined_call_operand.hbm [shape: f32[4,32], index: 1, kind: input, shape index: {}]
  %s2 = inlined_call_operand.hbm [shape: f32[32,32], index: 2, kind: input, shape index: {}]
  %s3 = inlined_call_operand.hbm [shape: f32[8,32], index: 3, kind: output, shape index: {}]
  %s4 = sld [smem:[#allocation0]]
  $region34: #{tpu_custom_call.1} parent=0
    _
  %s6 = ssub.s32 1, %s4
  %s7 = scalar_select 0, %s6, %s4
  $region1: #{tpu_custom_call.1} parent=0
    #allocation2 [shape = 'u8[16384]{0}', space=vmem, size = 0x4000, scoped, tag = 'input window, operand 0, single buffered']
    #allocation3 [shape = 's32[1]{0}', space=sflag, size = 0x4, scoped, tag = 'scoped memory for tpu_custom_call.1']
    #allocation4 [shape = 's32[1]{0}', space=sflag, size = 0x4, scoped, tag = 'scoped memory for tpu_custom_call.1']
    #allocation5 [shape = 'u8[2048]{0}', space=vmem, size = 0x800, scoped, tag = 'input window, operand 1, single buffered']
    #allocation6 [shape = 's32[1]{0}', space=sflag, size = 0x4, scoped, tag = 'scoped memory for tpu_custom_call.1']
    #allocation7 [shape = 'u8[16384]{0}', space=vmem, size = 0x4000, scoped, tag = 'input window, operand 2, single buffered']
    #allocation8 [shape = 'u8[4096]{0}', space=vmem, size = 0x1000, scoped, tag = 'output window, operand 0, single buffered']
    %8 = vsyncpa [#allocation3], 0
    %9 = vsyncpa [#allocation6], 0
    %10 = vsyncpa [#allocation4], 0
    // Predicated region
    $region2: #{tpu_custom_call.1} parent=1 // pred_check
      _
    $region3: #{tpu_custom_call.1} parent=1 // pred_check_branch
      %12 = sbr.rel (0) target = $region5
    $region4: #{tpu_custom_call.1} parent=1 // pred_region
      %14 = vsyncadd [#allocation3], 0
      %s15 = sshll.u32 %s0, 4
      %s16 = int_to_ptr.hbm [resolvable:$true] %s15
      %s17 = sshll.u32 [#allocation2], 4
      %s18 = int_to_ptr.vmem [resolvable:$true] %s17
      %23 = dma.hbm_to_vmem [thread:$0]  %s16, 512, %s18, [#allocation3], 64, 64, 4
    $region5: #{tpu_custom_call.1} parent=1 // pred_fallthru
      _
    // Predicated region
    $region6: #{tpu_custom_call.1} parent=1 // pred_check
      _
    $region7: #{tpu_custom_call.1} parent=1 // pred_check_branch
      %25 = sbr.rel (0) target = $region9
    $region8: #{tpu_custom_call.1} parent=1 // pred_region
      %27 = vsyncadd [#allocation6], 0
      %s29 = sshll.u32 %s1, 4
      %s30 = int_to_ptr.hbm [resolvable:$true] %s29
      %s31 = sshll.u32 [#allocation5], 4
      %s32 = int_to_ptr.vmem [resolvable:$true] %s31
      %34 = dma.hbm_to_vmem [thread:$0]  %s30, 64, %s32, [#allocation6]
    $region9: #{tpu_custom_call.1} parent=1 // pred_fallthru
      _
    // Predicated region
    $region10: #{tpu_custom_call.1} parent=1 // pred_check
      _
    $region11: #{tpu_custom_call.1} parent=1 // pred_check_branch
      %36 = sbr.rel (0) target = $region13
    $region12: #{tpu_custom_call.1} parent=1 // pred_region
      %38 = vsyncadd [#allocation6], 0
      %s39 = sshll.u32 %s2, 4
      %s40 = int_to_ptr.hbm [resolvable:$true] %s39
      %s41 = sshll.u32 [#allocation7], 4
      %s42 = int_to_ptr.vmem [resolvable:$true] %s41
      %47 = dma.hbm_to_vmem [thread:$0]  %s40, 512, %s42, [#allocation6], 128, 128, 8
    $region13: #{tpu_custom_call.1} parent=1 // pred_fallthru
      _
    // Predicated region
    $region14: #{tpu_custom_call.1} parent=1 // pred_check
      _
    $region15: #{tpu_custom_call.1} parent=1 // pred_check_branch
      %49 = sbr.rel (0) target = $region17
    $region16: #{tpu_custom_call.1} parent=1 // pred_region
      %51 = dma.done [#allocation3], 512
    $region17: #{tpu_custom_call.1} parent=1 // pred_fallthru
      _
    // Predicated region
    $region18: #{tpu_custom_call.1} parent=1 // pred_check
      _
    $region19: #{tpu_custom_call.1} parent=1 // pred_check_branch
      %53 = sbr.rel (0) target = $region21
    $region20: #{tpu_custom_call.1} parent=1 // pred_region
      %55 = dma.done [#allocation6], 64
    $region21: #{tpu_custom_call.1} parent=1 // pred_fallthru
      _
    // Predicated region
    $region22: #{tpu_custom_call.1} parent=1 // pred_check
      _
    $region23: #{tpu_custom_call.1} parent=1 // pred_check_branch
      %57 = sbr.rel (0) target = $region25
    $region24: #{tpu_custom_call.1} parent=1 // pred_region
      %59 = dma.done [#allocation6], 512
    $region25: #{tpu_custom_call.1} parent=1 // pred_fallthru
      _
    %v60 = vld [vmem:[#allocation2] sm:$0xf]
    %v61 = vld [vmem:[#allocation2 + $0x4] sm:$0xf]
    %v62 = vld [vmem:[#allocation2 + $0x8] sm:$0xf]
    %v63 = vld [vmem:[#allocation2 + $0xc] sm:$0xf]
    %v64 = vld [vmem:[#allocation2 + $0x10] sm:$0xf]
    %v65 = vld [vmem:[#allocation2 + $0x14] sm:$0xf]
    %v66 = vld [vmem:[#allocation2 + $0x18] sm:$0xf]
    %v67 = vld [vmem:[#allocation2 + $0x1c] sm:$0xf]
    %vm68 = vcmask 519168
    %v69 = vsel %vm68, %v60, 0.0
    %70 = vadd.xlane.f32.xlu0 %v69
    %v71 = vpop.xlane.xlu0 %70
    %v72 = vsel %vm68, %v61, 0.0
    %73 = vadd.xlane.f32.xlu0 %v72
    %v74 = vpop.xlane.xlu0 %73
    %v75 = vsel %vm68, %v62, 0.0
    %76 = vadd.xlane.f32.xlu0 %v75
    %v77 = vpop.xlane.xlu0 %76
    %v78 = vsel %vm68, %v63, 0.0
    %79 = vadd.xlane.f32.xlu0 %v78
    %v80 = vpop.xlane.xlu0 %79
    %v81 = vsel %vm68, %v64, 0.0
    %82 = vadd.xlane.f32.xlu0 %v81
    %v83 = vpop.xlane.xlu0 %82
    %v84 = vsel %vm68, %v65, 0.0
    %85 = vadd.xlane.f32.xlu0 %v84
    %v86 = vpop.xlane.xlu0 %85
    %v87 = vsel %vm68, %v66, 0.0
    %88 = vadd.xlane.f32.xlu0 %v87
    %v89 = vpop.xlane.xlu0 %88
    %v90 = vsel %vm68, %v67, 0.0
    %91 = vadd.xlane.f32.xlu0 %v90
    %v92 = vpop.xlane.xlu0 %91
    %v93 = vrcp.pop 64.0
    %v94 = vmul.f32 64.0, %v93
    %v95 = vsub.f32 1.0, %v94
    %v96 = vmul.f32 %v93, %v95
    %v97 = vadd.f32 %v93, %v96
    %vm98 = vweird.f32 %v93
    %v99 = vsel %vm98, %v93, %v97
    %v100 = vmul.f32 %v71, %v99
    %v101 = vmul.f32 %v74, %v99
    %v102 = vmul.f32 %v77, %v99
    %v103 = vmul.f32 %v80, %v99
    %v104 = vmul.f32 %v83, %v99
    %v105 = vmul.f32 %v86, %v99
    %v106 = vmul.f32 %v89, %v99
    %v107 = vmul.f32 %v92, %v99
    %v108 = vsel %vm68, %v60, -inf
    %109 = vmax.xlane.f32.xlu0 %v108
    %v110 = vpop.xlane.xlu0 %109
    %v111 = vsel %vm68, %v61, -inf
    %112 = vmax.xlane.f32.xlu0 %v111
    %v113 = vpop.xlane.xlu0 %112
    %v114 = vsel %vm68, %v62, -inf
    %115 = vmax.xlane.f32.xlu0 %v114
    %v116 = vpop.xlane.xlu0 %115
    %v117 = vsel %vm68, %v63, -inf
    %118 = vmax.xlane.f32.xlu0 %v117
    %v119 = vpop.xlane.xlu0 %118
    %v120 = vsel %vm68, %v64, -inf
    %121 = vmax.xlane.f32.xlu0 %v120
    %v122 = vpop.xlane.xlu0 %121
    %v123 = vsel %vm68, %v65, -inf
    %124 = vmax.xlane.f32.xlu0 %v123
    %v125 = vpop.xlane.xlu0 %124
    %v126 = vsel %vm68, %v66, -inf
    %127 = vmax.xlane.f32.xlu0 %v126
    %v128 = vpop.xlane.xlu0 %127
    %v129 = vsel %vm68, %v67, -inf
    %130 = vmax.xlane.f32.xlu0 %v129
    %v131 = vpop.xlane.xlu0 %130
    %v140 = vlaneseq
    %v141 = vand.u32 %v140, 127
    %v142 = vperm.slane %v100, %v141
    %v143 = vperm.slane %v101, %v141
    %v144 = vperm.slane %v102, %v141
    %v145 = vperm.slane %v103, %v141
    %v146 = vperm.slane %v104, %v141
    %v147 = vperm.slane %v105, %v141
    %v148 = vperm.slane %v106, %v141
    %v149 = vperm.slane %v107, %v141
    %vm150 = vcmask 1041409
    %v151 = vsel %vm150, %v143, %v142
    %vm152 = vcmask 1042434
    %v153 = vsel %vm152, %v144, %v151
    %vm154 = vcmask 1043459
    %v155 = vsel %vm154, %v145, %v153
    %vm156 = vcmask 1044484
    %v157 = vsel %vm156, %v146, %v155
    %vm158 = vcmask 1045509
    %v159 = vsel %vm158, %v147, %v157
    %vm160 = vcmask 1046534
    %v161 = vsel %vm160, %v148, %v159
    %vm162 = vcmask 1047559
    %v163 = vsel %vm162, %v149, %v161
    %v172 = vperm.slane %v110, %v141
    %v173 = vperm.slane %v113, %v141
    %v174 = vperm.slane %v116, %v141
    %v175 = vperm.slane %v119, %v141
    %v176 = vperm.slane %v122, %v141
    %v177 = vperm.slane %v125, %v141
    %v178 = vperm.slane %v128, %v141
    %v179 = vperm.slane %v131, %v141
    %v180 = vsel %vm150, %v173, %v172
    %v181 = vsel %vm152, %v174, %v180
    %v182 = vsel %vm154, %v175, %v181
    %v183 = vsel %vm156, %v176, %v182
    %v184 = vsel %vm158, %v177, %v183
    %v185 = vsel %vm160, %v178, %v184
    %v186 = vsel %vm162, %v179, %v185
    %v187 = vld [vmem:[#allocation5] sm:$0xf]
    %vm188 = vcmask 31744
    %v189 = vsel %vm188, %v163, 0
    %v191 = vsel %vm188, %v186, 0
    %vm193 = vcmask 1043456
    %v195 = vsel %vm193, %v187, 0
    %197 = vmatpush.msra.mxu0 0.0
    %198 = vmatpush.msra.mxu0 0.0
    %199 = vmatpush.msra.mxu0 0.0
    %200 = vmatpush.msra.mxu0 0.0
    %201 = vmatpush.msra.mxu0 0.0
    %202 = vmatpush.msra.mxu0 0.0
    %203 = vmatpush.msra.mxu0 0.0
    %204 = vmatpush.msra.mxu0 0.0
    %205 = vmatpush.msra.mxu0 0.0
    %206 = vmatpush.msra.mxu0 0.0
    %207 = vmatpush.msra.mxu0 0.0
    %208 = vmatpush.msra.mxu0 0.0
    %209 = vmatpush.msra.mxu0 0.0
    %210 = vmatpush.msra.mxu0 0.0
    %211 = vmatpush.msra.mxu0 0.0
    %v212 = vand.u32 %v195, 4294901760
    %213 = vmatpush.msra.mxu0 %v212
    %v214 = vand.u32 %v189, 4294901760
    %v215 = vsub.f32 %v189, %v214
    %v216 = vand.u32 %v215, 4294901760
    %v217 = vsub.f32 %v215, %v216
    %v218 = vand.u32 %v217, 4294901760
    %219 = vmatmul.f32.gmra.mxu0 %v218
    %v220 = vpop.f32.mrf.mxu0
    %v221 = vadd.f32 0.0, %v220
    %v222 = vand.u32 %v191, 4294901760
    %v223 = vsub.f32 %v191, %v222
    %v224 = vand.u32 %v223, 4294901760
    %v225 = vsub.f32 %v223, %v224
    %v226 = vand.u32 %v225, 4294901760
    %227 = vmatmul.f32.gmra.mxu0 %v226
    %v228 = vpop.f32.mrf.mxu0
    %v229 = vadd.f32 0.0, %v228
    %230 = vdwg.mxu0
    %231 = vmatpush.msra.mxu0 0.0
    %232 = vmatpush.msra.mxu0 0.0
    %233 = vmatpush.msra.mxu0 0.0
    %234 = vmatpush.msra.mxu0 0.0
    %235 = vmatpush.msra.mxu0 0.0
    %236 = vmatpush.msra.mxu0 0.0
    %237 = vmatpush.msra.mxu0 0.0
    %238 = vmatpush.msra.mxu0 0.0
    %239 = vmatpush.msra.mxu0 0.0
    %240 = vmatpush.msra.mxu0 0.0
    %241 = vmatpush.msra.mxu0 0.0
    %242 = vmatpush.msra.mxu0 0.0
    %243 = vmatpush.msra.mxu0 0.0
    %244 = vmatpush.msra.mxu0 0.0
    %245 = vmatpush.msra.mxu0 0.0
    %v246 = vand.u32 %v195, 4294901760
    %v247 = vsub.f32 %v195, %v246
    %v248 = vand.u32 %v247, 4294901760
    %v249 = vsub.f32 %v247, %v248
    %v250 = vand.u32 %v249, 4294901760
    %251 = vmatpush.msra.mxu0 %v250
    %v252 = vand.u32 %v189, 4294901760
    %253 = vmatmul.f32.gmra.mxu0 %v252
    %v254 = vpop.f32.mrf.mxu0
    %v255 = vadd.f32 %v221, %v254
    %v256 = vand.u32 %v191, 4294901760
    %257 = vmatmul.f32.gmra.mxu0 %v256
    %v258 = vpop.f32.mrf.mxu0
    %v259 = vadd.f32 %v229, %v258
    %260 = vdwg.mxu0
    %261 = vmatpush.msra.mxu0 0.0
    %262 = vmatpush.msra.mxu0 0.0
    %263 = vmatpush.msra.mxu0 0.0
    %264 = vmatpush.msra.mxu0 0.0
    %265 = vmatpush.msra.mxu0 0.0
    %266 = vmatpush.msra.mxu0 0.0
    %267 = vmatpush.msra.mxu0 0.0
    %268 = vmatpush.msra.mxu0 0.0
    %269 = vmatpush.msra.mxu0 0.0
    %270 = vmatpush.msra.mxu0 0.0
    %271 = vmatpush.msra.mxu0 0.0
    %272 = vmatpush.msra.mxu0 0.0
    %273 = vmatpush.msra.mxu0 0.0
    %274 = vmatpush.msra.mxu0 0.0
    %275 = vmatpush.msra.mxu0 0.0
    %v276 = vand.u32 %v195, 4294901760
    %v277 = vsub.f32 %v195, %v276
    %278 = vmatpush.msra.mxu0 %v277
    %v279 = vand.u32 %v189, 4294901760
    %v280 = vsub.f32 %v189, %v279
    %281 = vmatmul.f32.gmra.mxu0 %v280
    %v282 = vpop.f32.mrf.mxu0
    %v283 = vadd.f32 %v255, %v282
    %v284 = vand.u32 %v191, 4294901760
    %v285 = vsub.f32 %v191, %v284
    %286 = vmatmul.f32.gmra.mxu0 %v285
    %v287 = vpop.f32.mrf.mxu0
    %v288 = vadd.f32 %v259, %v287
    %289 = vdwg.mxu0
    %290 = vmatpush.msra.mxu0 0.0
    %291 = vmatpush.msra.mxu0 0.0
    %292 = vmatpush.msra.mxu0 0.0
    %293 = vmatpush.msra.mxu0 0.0
    %294 = vmatpush.msra.mxu0 0.0
    %295 = vmatpush.msra.mxu0 0.0
    %296 = vmatpush.msra.mxu0 0.0
    %297 = vmatpush.msra.mxu0 0.0
    %298 = vmatpush.msra.mxu0 0.0
    %299 = vmatpush.msra.mxu0 0.0
    %300 = vmatpush.msra.mxu0 0.0
    %301 = vmatpush.msra.mxu0 0.0
    %302 = vmatpush.msra.mxu0 0.0
    %303 = vmatpush.msra.mxu0 0.0
    %304 = vmatpush.msra.mxu0 0.0
    %v305 = vand.u32 %v195, 4294901760
    %306 = vmatpush.msra.mxu0 %v305
    %v307 = vand.u32 %v189, 4294901760
    %v308 = vsub.f32 %v189, %v307
    %v309 = vand.u32 %v308, 4294901760
    %310 = vmatmul.f32.gmra.mxu0 %v309
    %v311 = vpop.f32.mrf.mxu0
    %v312 = vadd.f32 %v283, %v311
    %v313 = vand.u32 %v191, 4294901760
    %v314 = vsub.f32 %v191, %v313
    %v315 = vand.u32 %v314, 4294901760
    %316 = vmatmul.f32.gmra.mxu0 %v315
    %v317 = vpop.f32.mrf.mxu0
    %v318 = vadd.f32 %v288, %v317
    %319 = vdwg.mxu0
    %320 = vmatpush.msra.mxu0 0.0
    %321 = vmatpush.msra.mxu0 0.0
    %322 = vmatpush.msra.mxu0 0.0
    %323 = vmatpush.msra.mxu0 0.0
    %324 = vmatpush.msra.mxu0 0.0
    %325 = vmatpush.msra.mxu0 0.0
    %326 = vmatpush.msra.mxu0 0.0
    %327 = vmatpush.msra.mxu0 0.0
    %328 = vmatpush.msra.mxu0 0.0
    %329 = vmatpush.msra.mxu0 0.0
    %330 = vmatpush.msra.mxu0 0.0
    %331 = vmatpush.msra.mxu0 0.0
    %332 = vmatpush.msra.mxu0 0.0
    %333 = vmatpush.msra.mxu0 0.0
    %334 = vmatpush.msra.mxu0 0.0
    %v335 = vand.u32 %v195, 4294901760
    %v336 = vsub.f32 %v195, %v335
    %v337 = vand.u32 %v336, 4294901760
    %338 = vmatpush.msra.mxu0 %v337
    %v339 = vand.u32 %v189, 4294901760
    %340 = vmatmul.f32.gmra.mxu0 %v339
    %v341 = vpop.f32.mrf.mxu0
    %v342 = vadd.f32 %v312, %v341
    %v343 = vand.u32 %v191, 4294901760
    %344 = vmatmul.f32.gmra.mxu0 %v343
    %v345 = vpop.f32.mrf.mxu0
    %v346 = vadd.f32 %v318, %v345
    %347 = vdwg.mxu0
    %348 = vmatpush.msra.mxu0 0.0
    %349 = vmatpush.msra.mxu0 0.0
    %350 = vmatpush.msra.mxu0 0.0
    %351 = vmatpush.msra.mxu0 0.0
    %352 = vmatpush.msra.mxu0 0.0
    %353 = vmatpush.msra.mxu0 0.0
    %354 = vmatpush.msra.mxu0 0.0
    %355 = vmatpush.msra.mxu0 0.0
    %356 = vmatpush.msra.mxu0 0.0
    %357 = vmatpush.msra.mxu0 0.0
    %358 = vmatpush.msra.mxu0 0.0
    %359 = vmatpush.msra.mxu0 0.0
    %360 = vmatpush.msra.mxu0 0.0
    %361 = vmatpush.msra.mxu0 0.0
    %362 = vmatpush.msra.mxu0 0.0
    %v363 = vand.u32 %v195, 4294901760
    %364 = vmatpush.msra.mxu0 %v363
    %v365 = vand.u32 %v189, 4294901760
    %366 = vmatmul.f32.gmra.mxu0 %v365
    %v367 = vpop.f32.mrf.mxu0
    %v368 = vadd.f32 %v342, %v367
    %v369 = vand.u32 %v191, 4294901760
    %370 = vmatmul.f32.gmra.mxu0 %v369
    %v371 = vpop.f32.mrf.mxu0
    %v372 = vadd.f32 %v346, %v371
    %373 = vdwg.mxu0
    %v374 = vmax.f32 %v368, 0.0
    %v375 = vmax.f32 %v372, 0.0
    %v376 = vld [vmem:[#allocation7] sm:$0xff]
    %v377 = vld [vmem:[#allocation7 + $0x8] sm:$0xff]
    %v378 = vld [vmem:[#allocation7 + $0x10] sm:$0xff]
    %v379 = vld [vmem:[#allocation7 + $0x18] sm:$0xff]
    %vm380 = vcmask 261120
    %v382 = vsel %vm380, %v374, 0
    %v385 = vsel %vm380, %v375, 0
    %387 = vmatpush.msra.mxu0 0.0
    %388 = vmatpush.msra.mxu0 0.0
    %389 = vmatpush.msra.mxu0 0.0
    %390 = vmatpush.msra.mxu0 0.0
    %391 = vmatpush.msra.mxu0 0.0
    %392 = vmatpush.msra.mxu0 0.0
    %393 = vmatpush.msra.mxu0 0.0
    %394 = vmatpush.msra.mxu0 0.0
    %395 = vmatpush.msra.mxu0 0.0
    %396 = vmatpush.msra.mxu0 0.0
    %397 = vmatpush.msra.mxu0 0.0
    %398 = vmatpush.msra.mxu0 0.0
    %v399 = vand.u32 %v379, 4294901760
    %400 = vmatpush.msra.mxu0 %v399
    %v401 = vand.u32 %v378, 4294901760
    %402 = vmatpush.msra.mxu0 %v401
    %v403 = vand.u32 %v377, 4294901760
    %404 = vmatpush.msra.mxu0 %v403
    %v405 = vand.u32 %v376, 4294901760
    %406 = vmatpush.msra.mxu0 %v405
    %v407 = vand.u32 %v382, 4294901760
    %v408 = vsub.f32 %v382, %v407
    %v409 = vand.u32 %v408, 4294901760
    %v410 = vsub.f32 %v408, %v409
    %v411 = vand.u32 %v410, 4294901760
    %412 = vmatmul.f32.gmra.mxu0 %v411
    %v413 = vpop.f32.mrf.mxu0
    %v414 = vadd.f32 0.0, %v413
    %v415 = vand.u32 %v385, 4294901760
    %v416 = vsub.f32 %v385, %v415
    %v417 = vand.u32 %v416, 4294901760
    %v418 = vsub.f32 %v416, %v417
    %v419 = vand.u32 %v418, 4294901760
    %420 = vmatmul.f32.gmra.mxu0 %v419
    %v421 = vpop.f32.mrf.mxu0
    %v422 = vadd.f32 0.0, %v421
    %423 = vdwg.mxu0
    %424 = vmatpush.msra.mxu0 0.0
    %425 = vmatpush.msra.mxu0 0.0
    %426 = vmatpush.msra.mxu0 0.0
    %427 = vmatpush.msra.mxu0 0.0
    %428 = vmatpush.msra.mxu0 0.0
    %429 = vmatpush.msra.mxu0 0.0
    %430 = vmatpush.msra.mxu0 0.0
    %431 = vmatpush.msra.mxu0 0.0
    %432 = vmatpush.msra.mxu0 0.0
    %433 = vmatpush.msra.mxu0 0.0
    %434 = vmatpush.msra.mxu0 0.0
    %435 = vmatpush.msra.mxu0 0.0
    %v436 = vand.u32 %v379, 4294901760
    %v437 = vsub.f32 %v379, %v436
    %v438 = vand.u32 %v437, 4294901760
    %v439 = vsub.f32 %v437, %v438
    %v440 = vand.u32 %v439, 4294901760
    %441 = vmatpush.msra.mxu0 %v440
    %v442 = vand.u32 %v378, 4294901760
    %v443 = vsub.f32 %v378, %v442
    %v444 = vand.u32 %v443, 4294901760
    %v445 = vsub.f32 %v443, %v444
    %v446 = vand.u32 %v445, 4294901760
    %447 = vmatpush.msra.mxu0 %v446
    %v448 = vand.u32 %v377, 4294901760
    %v449 = vsub.f32 %v377, %v448
    %v450 = vand.u32 %v449, 4294901760
    %v451 = vsub.f32 %v449, %v450
    %v452 = vand.u32 %v451, 4294901760
    %453 = vmatpush.msra.mxu0 %v452
    %v454 = vand.u32 %v376, 4294901760
    %v455 = vsub.f32 %v376, %v454
    %v456 = vand.u32 %v455, 4294901760
    %v457 = vsub.f32 %v455, %v456
    %v458 = vand.u32 %v457, 4294901760
    %459 = vmatpush.msra.mxu0 %v458
    %v460 = vand.u32 %v382, 4294901760
    %461 = vmatmul.f32.gmra.mxu0 %v460
    %v462 = vpop.f32.mrf.mxu0
    %v463 = vadd.f32 %v414, %v462
    %v464 = vand.u32 %v385, 4294901760
    %465 = vmatmul.f32.gmra.mxu0 %v464
    %v466 = vpop.f32.mrf.mxu0
    %v467 = vadd.f32 %v422, %v466
    %468 = vdwg.mxu0
    %469 = vmatpush.msra.mxu0 0.0
    %470 = vmatpush.msra.mxu0 0.0
    %471 = vmatpush.msra.mxu0 0.0
    %472 = vmatpush.msra.mxu0 0.0
    %473 = vmatpush.msra.mxu0 0.0
    %474 = vmatpush.msra.mxu0 0.0
    %475 = vmatpush.msra.mxu0 0.0
    %476 = vmatpush.msra.mxu0 0.0
    %477 = vmatpush.msra.mxu0 0.0
    %478 = vmatpush.msra.mxu0 0.0
    %479 = vmatpush.msra.mxu0 0.0
    %480 = vmatpush.msra.mxu0 0.0
    %v481 = vand.u32 %v379, 4294901760
    %v482 = vsub.f32 %v379, %v481
    %483 = vmatpush.msra.mxu0 %v482
    %v484 = vand.u32 %v378, 4294901760
    %v485 = vsub.f32 %v378, %v484
    %486 = vmatpush.msra.mxu0 %v485
    %v487 = vand.u32 %v377, 4294901760
    %v488 = vsub.f32 %v377, %v487
    %489 = vmatpush.msra.mxu0 %v488
    %v490 = vand.u32 %v376, 4294901760
    %v491 = vsub.f32 %v376, %v490
    %492 = vmatpush.msra.mxu0 %v491
    %v493 = vand.u32 %v382, 4294901760
    %v494 = vsub.f32 %v382, %v493
    %495 = vmatmul.f32.gmra.mxu0 %v494
    %v496 = vpop.f32.mrf.mxu0
    %v497 = vadd.f32 %v463, %v496
    %v498 = vand.u32 %v385, 4294901760
    %v499 = vsub.f32 %v385, %v498
    %500 = vmatmul.f32.gmra.mxu0 %v499
    %v501 = vpop.f32.mrf.mxu0
    %v502 = vadd.f32 %v467, %v501
    %503 = vdwg.mxu0
    %504 = vmatpush.msra.mxu0 0.0
    %505 = vmatpush.msra.mxu0 0.0
    %506 = vmatpush.msra.mxu0 0.0
    %507 = vmatpush.msra.mxu0 0.0
    %508 = vmatpush.msra.mxu0 0.0
    %509 = vmatpush.msra.mxu0 0.0
    %510 = vmatpush.msra.mxu0 0.0
    %511 = vmatpush.msra.mxu0 0.0
    %512 = vmatpush.msra.mxu0 0.0
    %513 = vmatpush.msra.mxu0 0.0
    %514 = vmatpush.msra.mxu0 0.0
    %515 = vmatpush.msra.mxu0 0.0
    %v516 = vand.u32 %v379, 4294901760
    %517 = vmatpush.msra.mxu0 %v516
    %v518 = vand.u32 %v378, 4294901760
    %519 = vmatpush.msra.mxu0 %v518
    %v520 = vand.u32 %v377, 4294901760
    %521 = vmatpush.msra.mxu0 %v520
    %v522 = vand.u32 %v376, 4294901760
    %523 = vmatpush.msra.mxu0 %v522
    %v524 = vand.u32 %v382, 4294901760
    %v525 = vsub.f32 %v382, %v524
    %v526 = vand.u32 %v525, 4294901760
    %527 = vmatmul.f32.gmra.mxu0 %v526
    %v528 = vpop.f32.mrf.mxu0
    %v529 = vadd.f32 %v497, %v528
    %v530 = vand.u32 %v385, 4294901760
    %v531 = vsub.f32 %v385, %v530
    %v532 = vand.u32 %v531, 4294901760
    %533 = vmatmul.f32.gmra.mxu0 %v532
    %v534 = vpop.f32.mrf.mxu0
    %v535 = vadd.f32 %v502, %v534
    %536 = vdwg.mxu0
    %537 = vmatpush.msra.mxu0 0.0
    %538 = vmatpush.msra.mxu0 0.0
    %539 = vmatpush.msra.mxu0 0.0
    %540 = vmatpush.msra.mxu0 0.0
    %541 = vmatpush.msra.mxu0 0.0
    %542 = vmatpush.msra.mxu0 0.0
    %543 = vmatpush.msra.mxu0 0.0
    %544 = vmatpush.msra.mxu0 0.0
    %545 = vmatpush.msra.mxu0 0.0
    %546 = vmatpush.msra.mxu0 0.0
    %547 = vmatpush.msra.mxu0 0.0
    %548 = vmatpush.msra.mxu0 0.0
    %v549 = vand.u32 %v379, 4294901760
    %v550 = vsub.f32 %v379, %v549
    %v551 = vand.u32 %v550, 4294901760
    %552 = vmatpush.msra.mxu0 %v551
    %v553 = vand.u32 %v378, 4294901760
    %v554 = vsub.f32 %v378, %v553
    %v555 = vand.u32 %v554, 4294901760
    %556 = vmatpush.msra.mxu0 %v555
    %v557 = vand.u32 %v377, 4294901760
    %v558 = vsub.f32 %v377, %v557
    %v559 = vand.u32 %v558, 4294901760
    %560 = vmatpush.msra.mxu0 %v559
    %v561 = vand.u32 %v376, 4294901760
    %v562 = vsub.f32 %v376, %v561
    %v563 = vand.u32 %v562, 4294901760
    %564 = vmatpush.msra.mxu0 %v563
    %v565 = vand.u32 %v382, 4294901760
    %566 = vmatmul.f32.gmra.mxu0 %v565
    %v567 = vpop.f32.mrf.mxu0
    %v568 = vadd.f32 %v529, %v567
    %v569 = vand.u32 %v385, 4294901760
    %570 = vmatmul.f32.gmra.mxu0 %v569
    %v571 = vpop.f32.mrf.mxu0
    %v572 = vadd.f32 %v535, %v571
    %573 = vdwg.mxu0
    %574 = vmatpush.msra.mxu0 0.0
    %575 = vmatpush.msra.mxu0 0.0
    %576 = vmatpush.msra.mxu0 0.0
    %577 = vmatpush.msra.mxu0 0.0
    %578 = vmatpush.msra.mxu0 0.0
    %579 = vmatpush.msra.mxu0 0.0
    %580 = vmatpush.msra.mxu0 0.0
    %581 = vmatpush.msra.mxu0 0.0
    %582 = vmatpush.msra.mxu0 0.0
    %583 = vmatpush.msra.mxu0 0.0
    %584 = vmatpush.msra.mxu0 0.0
    %585 = vmatpush.msra.mxu0 0.0
    %v586 = vand.u32 %v379, 4294901760
    %587 = vmatpush.msra.mxu0 %v586
    %v588 = vand.u32 %v378, 4294901760
    %589 = vmatpush.msra.mxu0 %v588
    %v590 = vand.u32 %v377, 4294901760
    %591 = vmatpush.msra.mxu0 %v590
    %v592 = vand.u32 %v376, 4294901760
    %593 = vmatpush.msra.mxu0 %v592
    %v594 = vand.u32 %v382, 4294901760
    %595 = vmatmul.f32.gmra.mxu0 %v594
    %v596 = vpop.f32.mrf.mxu0
    %v597 = vadd.f32 %v568, %v596
    %v598 = vand.u32 %v385, 4294901760
    %599 = vmatmul.f32.gmra.mxu0 %v598
    %v600 = vpop.f32.mrf.mxu0
    %v601 = vadd.f32 %v572, %v600
    %602 = vdwg.mxu0
    %v603 = vadd.f32 %v597, %v601
    %v604 = vxor.u32 %v603, 2147483648
    %v605 = vmul.f32 %v604, 1.442695
    %v606 = vpow.pop %v605
    %v607 = vadd.f32 %v606, 1.0
    %v608 = vrcp.pop %v607
    %v609 = vmul.f32 %v607, %v608
    %v610 = vsub.f32 1.0, %v609
    %v611 = vmul.f32 %v608, %v610
    %v612 = vadd.f32 %v608, %v611
    %vm613 = vweird.f32 %v607
    %vm614 = vweird.f32 %v608
    %vm615 = vmor %vm613, %vm614
    %v616 = vsel %vm615, %v608, %v612
    %v617 = vand.u32 2147483647, %v607
    %vm618 = vcmp.eq.f32.partialorder %v617, 8.507059e+37
    %v619 = vand.u32 %v607, 2147483648
    %v620 = vor.u32 1.1754944e-38, %v619
    %v621 = vsel %vm618, %v620, %v616
    %v622 = vmul.f32 1.0, %v621
    %623 = vst.msk [vmem:[#allocation8] sm:$0xff] %vm380, %v622
    // Predicated region
    $region26: #{tpu_custom_call.1} parent=1 // pred_check
      _
    $region27: #{tpu_custom_call.1} parent=1 // pred_check_branch
      %625 = sbr.rel (0) target = $region29
    $region28: #{tpu_custom_call.1} parent=1 // pred_region
      %627 = vsyncadd [#allocation4], 0
      %s629 = sshll.u32 [#allocation8], 4
      %s630 = int_to_ptr.vmem [resolvable:$true] %s629
      %s631 = sshll.u32 %s3, 4
      %s632 = int_to_ptr.hbm [resolvable:$true] %s631
      %634 = dma.vmem_to_hbm [thread:$0]  %s630, 128, %s632, [#allocation4]
    $region29: #{tpu_custom_call.1} parent=1 // pred_fallthru
      _
    // Predicated region
    $region30: #{tpu_custom_call.1} parent=1 // pred_check
      _
    $region31: #{tpu_custom_call.1} parent=1 // pred_check_branch
      %636 = sbr.rel (0) target = $region33
    $region32: #{tpu_custom_call.1} parent=1 // pred_region
      %638 = dma.done [#allocation4], 128
    $region33: #{tpu_custom_call.1} parent=1 // pred_fallthru
      _
    %639 = vsyncpa [#allocation3], 1
    %640 = vsyncpa [#allocation6], 1
    %641 = vsyncpa [#allocation4], 1

</llo_original>
